<compile_context>
chip_gen: v6e
topology: v6e:2x2x1
jax: 0.10.0
libtpu: 0.0.40
codegen_flags: <defaults>
</compile_context>

<pallas_src>
import functools

import jax
import jax.numpy as jnp
from jax.experimental import pallas as pl
from jax.experimental.pallas import tpu as pltpu


def _cross_entropy_kernel(x_ref, y_ref, out_ref, *, n_total, block_rows):
    # x_ref  : (TN, C) input dtype (f32/bf16/...) in VMEM
    # y_ref  : (TN, 1) int32 in VMEM
    # out_ref: (TN, 1) f32 in VMEM -> per-row log(P_label + 1e-7)
    i = pl.program_id(0)

    x = x_ref[...].astype(jnp.float32)          # upcast in vregs, not in HBM
    tn, c = x.shape

    # --- softmax denominator over the class axis ---
    m = jnp.max(x, axis=1, keepdims=True)       # (TN, 1)
    e = jnp.exp(x - m)                          # (TN, C)  (the only N*C EUP op)
    s = jnp.sum(e, axis=1, keepdims=True)       # (TN, 1)

    # --- gather the true-class numerator via compare + select + row reduce ---
    col_ids = jax.lax.broadcasted_iota(jnp.int32, (tn, c), 1)
    e_label = jnp.sum(
        jnp.where(col_ids == y_ref[...], e, jnp.float32(0.0)),
        axis=1, keepdims=True)                  # (TN, 1)

    # --- per-row loss, exact identity (no per-row divide):
    #     log(e_label / s + 1e-7) == log(e_label + 1e-7 * s) - log(s)
    log_p = jnp.log(e_label + jnp.float32(1e-7) * s) - jnp.log(s)   # (TN, 1)

    # --- zero out padded rows of the last (partial) tile before writeback ---
    row_ids = i * block_rows + jax.lax.broadcasted_iota(jnp.int32, (tn, 1), 0)
    out_ref[...] = jnp.where(row_ids < n_total, log_p, jnp.float32(0.0))


def _vmem_limits():
    """(per-kernel live-VMEM budget, vmem_limit_bytes) — generation aware."""
    cap = 64 * 1024 * 1024                      # conservative default (v7x per-TC)
    try:
        info = pltpu.get_tpu_info()
        cap = int(getattr(info, "vmem_capacity_bytes", cap))
    except Exception:
        pass                                    # unknown chip -> keep v7x-safe default
    budget = min(cap // 3, 40 * 1024 * 1024)    # v7x ~21 MiB, v5e/v6e 40 MiB
    limit = min(cap - (8 << 20), 2 * budget + (8 << 20))
    limit = max(limit, 32 << 20)
    return budget, limit


def _pick_block_rows(n, c, itemsize, vmem_budget_bytes):
    """Largest multiple-of-8 row tile whose *total* live VMEM fits the budget.

    Per row we account for the 2x double-buffered input tile plus ~5 full-tile
    f32 temporaries (x_f32, x - m, exp, compare/select copy, slack).
    """
    per_row_bytes = 2 * c * itemsize + 20 * c
    rows = vmem_budget_bytes // max(1, per_row_bytes)
    rows = (int(rows) // 8) * 8
    rows = max(8, rows)
    if rows >= n:
        return n
    return rows


def our_cross_entropy(x, y, *, block_rows=None):
    """x: [N, C] float (f32/bf16/...), y: [N] int labels in [0, C).

    Returns the scalar f32 loss  -mean_N( log(softmax(x)[n, y[n]] + 1e-7) ).
    """
    n, c = x.shape
    budget, vmem_limit = _vmem_limits()
    if block_rows is None:
        block_rows = _pick_block_rows(n, c, jnp.dtype(x.dtype).itemsize, budget)
    block_rows = max(1, min(block_rows, n))
    num_blocks = pl.cdiv(n, block_rows)

    y_col = y.astype(jnp.int32).reshape(n, 1)

    kernel = functools.partial(
        _cross_entropy_kernel, n_total=n, block_rows=block_rows)

    per_row_logp = pl.pallas_call(
        kernel,
        out_shape=jax.ShapeDtypeStruct((n, 1), jnp.float32),
        grid_spec=pltpu.PrefetchScalarGridSpec(
            num_scalar_prefetch=0,
            grid=(num_blocks,),
            in_specs=[
                pl.BlockSpec((block_rows, c), lambda i: (i, 0)),
                pl.BlockSpec((block_rows, 1), lambda i: (i, 0)),
            ],
            out_specs=pl.BlockSpec((block_rows, 1), lambda i: (i, 0)),
        ),
        compiler_params=pltpu.CompilerParams(
            # Every tile is independent -> shard across TensorCores (v7x megacore).
            dimension_semantics=("parallel",),
            vmem_limit_bytes=vmem_limit,
        ),
    )(x, y_col)

    # Tiny final reduction (mean over N) in plain JAX.
    return -(jnp.sum(per_row_logp) / jnp.float32(n))


def _reference(x, y):
    # Pure-JAX reference matching the PyTorch module exactly.
    p = jax.nn.softmax(x.astype(jnp.float32), axis=1)
    yoh = jax.nn.one_hot(y, x.shape[1], dtype=jnp.float32)
    loss = yoh * jnp.log(p + 1e-07)
    return -jnp.mean(jnp.sum(loss, axis=1), axis=0)


if __name__ == "__main__":
    key = jax.random.PRNGKey(0)

    # Case 1: small [batch, num_classes] input, single tile, f32.
    k1, k2, k3, k4 = jax.random.split(key, 4)
    N1, C1 = 8, 32
    x1 = jax.random.normal(k1, (N1, C1), dtype=jnp.float32)
    y1 = jax.random.randint(k2, (N1,), 0, C1, dtype=jnp.int32)
    loss1 = our_cross_entropy(x1, y1)
    jax.block_until_ready(loss1)
    ref1 = _reference(x1, y1)
    assert jnp.allclose(loss1, ref1, atol=1e-5, rtol=1e-5), (loss1, ref1)

    # Case 2: forces the tiled path with a partial last tile
    # (N=40 not a multiple of block_rows=16) to exercise row masking.
    N2, C2 = 40, 128
    x2 = jax.random.normal(k3, (N2, C2), dtype=jnp.float32)
    y2 = jax.random.randint(k4, (N2,), 0, C2, dtype=jnp.int32)
    loss2 = our_cross_entropy(x2, y2, block_rows=16)
    jax.block_until_ready(loss2)
    ref2 = _reference(x2, y2)
    assert jnp.allclose(loss2, ref2, atol=1e-5, rtol=1e-5), (loss2, ref2)

    # Case 3: bf16 input stays bf16 in HBM (no wrapper cast); upcast in-kernel.
    x3 = x2.astype(jnp.bfloat16)
    loss3 = our_cross_entropy(x3, y2, block_rows=16)
    jax.block_until_ready(loss3)
    ref3 = _reference(x3, y2)
    assert jnp.allclose(loss3, ref3, atol=1e-3, rtol=1e-3), (loss3, ref3)

    print("KERNEL_OK")
</pallas_src>

<mosaic_0001>
module attributes {stable_mosaic.version = 11 : i64} {
  func.func @_cross_entropy_kernel(%arg0: i32, %arg1: memref<8x32xf32, #tpu.memory_space<vmem>>, %arg2: memref<8x1xi32, #tpu.memory_space<vmem>>, %arg3: memref<8x1xf32, #tpu.memory_space<vmem>>) attributes {dimension_semantics = [#tpu.dimension_semantics<parallel>], iteration_bounds = array<i64: 1>, scalar_prefetch = 0 : i64, scratch_operands = 0 : i64, tpu.core_type = #tpu.core_type<tc>, window_params = [{transform_indices = @transform_0, window_bounds = array<i64: 8, 32>}, {transform_indices = @transform_1, window_bounds = array<i64: 8, 1>}, {transform_indices = @transform_2, window_bounds = array<i64: 8, 1>}]} {
    %c0 = arith.constant 0 : index
    %c0_0 = arith.constant 0 : index
    %0 = vector.load %arg1[%c0, %c0_0] : memref<8x32xf32, #tpu.memory_space<vmem>>, vector<8x32xf32>
    %cst = arith.constant dense<0xFF800000> : vector<8xf32>
    %1 = vector.multi_reduction <maximumf>, %0, %cst [1] : vector<8x32xf32> to vector<8xf32>
    %2 = vector.shape_cast %1 : vector<8xf32> to vector<8x1xf32>
    %3 = vector.broadcast %2 : vector<8x1xf32> to vector<8x32xf32>
    %4 = arith.subf %0, %3 : vector<8x32xf32>
    %5 = math.exp %4 : vector<8x32xf32>
    %cst_1 = arith.constant dense<0.000000e+00> : vector<8xf32>
    %6 = vector.multi_reduction <add>, %5, %cst_1 [1] : vector<8x32xf32> to vector<8xf32>
    %7 = vector.shape_cast %6 : vector<8xf32> to vector<8x1xf32>
    %8 = tpu.iota {dimensions = array<i32: 1>} : vector<8x32xi32>
    %c0_2 = arith.constant 0 : index
    %c0_3 = arith.constant 0 : index
    %9 = vector.load %arg2[%c0_2, %c0_3] : memref<8x1xi32, #tpu.memory_space<vmem>>, vector<8x1xi32>
    %10 = vector.broadcast %9 : vector<8x1xi32> to vector<8x32xi32>
    %11 = arith.cmpi eq, %8, %10 : vector<8x32xi32>
    %cst_4 = arith.constant 0.000000e+00 : f32
    %12 = vector.broadcast %cst_4 : f32 to vector<8x32xf32>
    %13 = arith.select %11, %5, %12 : vector<8x32xi1>, vector<8x32xf32>
    %cst_5 = arith.constant dense<0.000000e+00> : vector<8xf32>
    %14 = vector.multi_reduction <add>, %13, %cst_5 [1] : vector<8x32xf32> to vector<8xf32>
    %15 = vector.shape_cast %14 : vector<8xf32> to vector<8x1xf32>
    %cst_6 = arith.constant 1.000000e-07 : f32
    %16 = vector.broadcast %cst_6 : f32 to vector<8x1xf32>
    %17 = arith.mulf %16, %7 : vector<8x1xf32>
    %18 = arith.addf %15, %17 : vector<8x1xf32>
    %19 = math.log %18 : vector<8x1xf32>
    %20 = math.log %7 : vector<8x1xf32>
    %21 = arith.subf %19, %20 : vector<8x1xf32>
    %c8_i32 = arith.constant 8 : i32
    %22 = arith.muli %arg0, %c8_i32 : i32
    %23 = tpu.iota {dimensions = array<i32: 0>} : vector<8x1xi32>
    %24 = vector.broadcast %22 : i32 to vector<8x1xi32>
    %25 = arith.addi %24, %23 : vector<8x1xi32>
    %c8_i32_7 = arith.constant 8 : i32
    %26 = vector.broadcast %c8_i32_7 : i32 to vector<8x1xi32>
    %27 = arith.cmpi slt, %25, %26 : vector<8x1xi32>
    %cst_8 = arith.constant 0.000000e+00 : f32
    %28 = vector.broadcast %cst_8 : f32 to vector<8x1xf32>
    %29 = arith.select %27, %21, %28 : vector<8x1xi1>, vector<8x1xf32>
    %c0_9 = arith.constant 0 : index
    %c0_10 = arith.constant 0 : index
    %30 = vector.load %arg3[%c0_9, %c0_10] : memref<8x1xf32, #tpu.memory_space<vmem>>, vector<8x1xf32>
    tpu.vector_store %arg3[%c0_9, %c0_10], %29 {strides = array<i32>} : memref<8x1xf32, #tpu.memory_space<vmem>>, vector<8x1xf32>,
    return
  }
  func.func @transform_0(%arg0: i32) -> (i32, i32) {
    %c0_i32 = arith.constant 0 : i32
    %c0_i32_0 = arith.constant 0 : i32
    return %arg0, %c0_i32 : i32, i32
  }
  func.func @transform_1(%arg0: i32) -> (i32, i32) {
    %c0_i32 = arith.constant 0 : i32
    %c0_i32_0 = arith.constant 0 : i32
    return %arg0, %c0_i32 : i32, i32
  }
  func.func @transform_2(%arg0: i32) -> (i32, i32) {
    %c0_i32 = arith.constant 0 : i32
    %c0_i32_0 = arith.constant 0 : i32
    return %arg0, %c0_i32 : i32, i32
  }
}

</mosaic_0001>

<llo_original>
// kernel: tpu_custom_call.1
$region0: #{tpu_custom_call.1}
  #allocation0 [shape = 'u32[]', space=smem, size = 0x4, offset = 0x4, fixed_abs, tag = 'smem constant byte address 0x4 - core index']
  #allocation1 [shape = 'u32[144,128]{1,0:T(1,128)}', space=vmem, size = 0x12000, scoped, tag = 'internal scratch']
  %s0 = inlined_call_operand.vmem [shape: f32[8,32], index: 0, kind: input, shape index: {}]
  %s1 = inlined_call_operand.vmem [shape: s32[8,1], index: 1, kind: input, shape index: {}]
  %s2 = inlined_call_operand.vmem [shape: f32[8,1], index: 2, kind: output, shape index: {}]
  %s3 = sld [smem:[#allocation0]]
  $region18: #{tpu_custom_call.1} parent=0
    _
  %s5 = ssub.s32 1, %s3
  %s6 = scalar_select 0, %s5, %s3
  // Predicated region
  $region2: #{tpu_custom_call.1} parent=0 // pred_check
    _
  $region3: #{tpu_custom_call.1} parent=0 // pred_check_branch
    %8 = sbr.rel (0) target = $region5
  $region4: #{tpu_custom_call.1} parent=0 // pred_region
    _
  $region5: #{tpu_custom_call.1} parent=0 // pred_fallthru
    _
  // Predicated region
  $region6: #{tpu_custom_call.1} parent=0 // pred_check
    _
  $region7: #{tpu_custom_call.1} parent=0 // pred_check_branch
    %10 = sbr.rel (0) target = $region9
  $region8: #{tpu_custom_call.1} parent=0 // pred_region
    _
  $region9: #{tpu_custom_call.1} parent=0 // pred_fallthru
    _
  %v11 = vld [vmem:[%s0] sm:$0xff]
  %vm12 = vcmask 261120
  %v13 = vsel %vm12, %v11, -inf
  %14 = vmax.xlane.f32.xlu0 %v13
  %v15 = vpop.xlane.xlu0 %14
  %v16 = vsub.f32 %v11, %v15
  %v17 = vmul.f32 %v16, 1.442695
  %v18 = vpow.pop %v17
  %v19 = vsel %vm12, %v18, 0.0
  %20 = vadd.xlane.f32.xlu0 %v19
  %v21 = vpop.xlane.xlu0 %20
  %v22 = vlaneseq
  %v23 = vand.u32 %v22, 127
  %v24 = vld [vmem:[%s1] sm:$0xff]
  %25 = vset.pattern.permute.xlu0 0
  %26 = vperm.xlu0 %25, %v24
  %v27 = vpop.permute.xlu0 %26
  %vm28 = vcmp.eq.s32.totalorder %v23, %v27
  %v29 = vsel %vm28, %v18, 0.0
  %v30 = vsel %vm12, %v29, 0.0
  %31 = vadd.xlane.f32.xlu0 %v30
  %v32 = vpop.xlane.xlu0 %31
  %v33 = vmul.f32 %v21, 1e-07
  %v34 = vadd.f32 %v32, %v33
  %v35 = vlog2.pop %v34
  %v36 = vmul.f32 %v35, 0.6931472
  %v37 = vlog2.pop %v21
  %v38 = vmul.f32 %v37, 0.6931472
  %v39 = vsub.f32 %v36, %v38
  %s40 = smul.u32 0, 8
  %v41 = vlaneseq
  %v42 = vshrl.u32 %v41, 7
  %v43 = vstv %s40
  %v44 = vadd.s32 %v43, %v42
  %vm45 = vcmp.lt.s32.totalorder %v44, 8
  %v46 = vsel %vm45, %v39, 0.0
  %vm47 = vcmask 7168
  %48 = vst.msk [vmem:[%s2] sm:$0xff] %vm47, %v46
  // Predicated region
  $region10: #{tpu_custom_call.1} parent=0 // pred_check
    _
  $region11: #{tpu_custom_call.1} parent=0 // pred_check_branch
    %50 = sbr.rel (0) target = $region13
  $region12: #{tpu_custom_call.1} parent=0 // pred_region
    _
  $region13: #{tpu_custom_call.1} parent=0 // pred_fallthru
    _
  // Predicated region
  $region14: #{tpu_custom_call.1} parent=0 // pred_check
    _
  $region15: #{tpu_custom_call.1} parent=0 // pred_check_branch
    %52 = sbr.rel (0) target = $region17
  $region16: #{tpu_custom_call.1} parent=0 // pred_region
    _
  $region17: #{tpu_custom_call.1} parent=0 // pred_fallthru
    _

</llo_original>
